<compile_context>
chip_gen: v7x
topology: tpu7x:2x2x1
jax: 0.10.0
libtpu: 0.0.40
codegen_flags: <defaults>
</compile_context>

<pallas_src>
import functools

import jax
import jax.numpy as jnp
from jax.experimental import pallas as pl
from jax.experimental.pallas import tpu as pltpu

# Explicit scoped-VMEM budget: safe on v5e/v6e (128 MiB phys) and v7x (64 MiB).
_VMEM_LIMIT = 32 * 1024 * 1024


def _round_up(x, m):
    return (x + m - 1) // m * m


def _largest_divisor_leq(n, cap):
    for d in range(min(cap, n), 0, -1):
        if n % d == 0:
            return d
    return 1


def _pick_band(Ho, Wo, target_rows=512):
    """Largest divisor Hb of Ho such that Hb * Wo <= target_rows (at least 1)."""
    best = 1
    for d in range(1, Ho + 1):
        if Ho % d == 0 and d * Wo <= target_rows:
            best = d
    return best


# ------------------------- kernel 1: 1x1 conv + BN (+relu) -------------------


def _matmul_bias_act_kernel(x_ref, w_ref, b_ref, o_ref, acc_ref, *, in_relu,
                            out_relu):
    @pl.when(pl.program_id(1) == 0)
    def _init():
        acc_ref[...] = jnp.zeros_like(acc_ref)

    x = x_ref[...]
    if in_relu:                      # block-input relu fused into the matmul
        x = jnp.maximum(x, 0.0)
    acc_ref[...] += jnp.dot(x, w_ref[...], preferred_element_type=jnp.float32)

    @pl.when(pl.program_id(1) == pl.num_programs(1) - 1)
    def _fin():
        y = acc_ref[...] + b_ref[...]
        if out_relu:
            y = jnp.maximum(y, 0.0)
        o_ref[...] = y.astype(o_ref.dtype)


def matmul_bias_act(x2d, w, bias, *, in_relu, out_relu, out_dtype):
    """Fused 1x1 conv (matmul) + bias + optional input/output ReLU.

    bf16 in, f32 accumulation.  M tiled at up to 512 rows (padded to a tile
    multiple); K tiled with a VMEM f32 accumulator so large-K stages keep
    per-step VMEM flat.
    """
    M, K = x2d.shape
    Cout = w.shape[1]
    tm = min(512, _round_up(M, 8))
    Mp = _round_up(M, tm)
    if Mp != M:
        x2d = jnp.pad(x2d, ((0, Mp - M), (0, 0)))
    tk = _largest_divisor_leq(K, 512)

    out = pl.pallas_call(
        functools.partial(_matmul_bias_act_kernel, in_relu=in_relu,
                          out_relu=out_relu),
        out_shape=jax.ShapeDtypeStruct((Mp, Cout), out_dtype),
        grid=(Mp // tm, K // tk),
        in_specs=[
            pl.BlockSpec((tm, tk), lambda i, k: (i, k)),
            pl.BlockSpec((tk, Cout), lambda i, k: (k, 0)),
            pl.BlockSpec((1, Cout), lambda i, k: (0, 0)),
        ],
        out_specs=pl.BlockSpec((tm, Cout), lambda i, k: (i, 0)),
        scratch_shapes=[pltpu.VMEM((tm, Cout), jnp.float32)],
        compiler_params=pltpu.CompilerParams(
            dimension_semantics=("parallel", "arbitrary"),
            vmem_limit_bytes=_VMEM_LIMIT),
    )(x2d, w, bias.reshape(1, -1))
    return out[:M] if Mp != M else out


# -------- kernel 2: conv2(3x3)+bn2+relu + conv3(1x1)+bn3 + residual ----------


def _fused_res_block_kernel(h1_ref, x_ref, w2_ref, b2_ref, w3_ref, b3_ref,
                            *rest, stride, Hb, Wo, has_ds):
    if has_ds:
        wd_ref, bd_ref, o_ref, xp = rest
    else:
        o_ref, xp = rest

    H, W, Cw = h1_ref.shape[1], h1_ref.shape[2], h1_ref.shape[3]
    Cin = x_ref.shape[3]
    Cout = o_ref.shape[3]
    band = pl.program_id(1)

    # Build the zero-padded conv1 activation once per image in a VMEM scratch
    # (replaces the host-side jnp.pad => saves a full HBM pass over h1).
    @pl.when(band == 0)
    def _pad():
        xp[...] = jnp.zeros_like(xp)
        xp[1:H + 1, 1:W + 1, :] = h1_ref[0]

    row0 = pl.multiple_of(band * (Hb * stride), Hb * stride)
    hin = (Hb - 1) * stride + 3                     # rows incl. 3x3 halo
    slab = xp[pl.ds(row0, hin), :, :]               # (hin, W+2, Cw), bf16

    # conv2: 3x3, stride, pad=1 -> 9 shifted-tap matmuls, f32 accumulation.
    # TODO(synk): fold kw taps into a fat-K (3*Cw) matmul for MXU utilization.
    acc = jnp.zeros((Hb * Wo, Cw), jnp.float32)
    for kh in range(3):
        for kw in range(3):
            tap = jax.lax.slice(
                slab, (kh, kw, 0),
                (kh + (Hb - 1) * stride + 1, kw + (Wo - 1) * stride + 1, Cw),
                (stride, stride, 1))                # (Hb, Wo, Cw)
            acc = acc + jnp.dot(tap.reshape(Hb * Wo, Cw), w2_ref[kh, kw],
                                preferred_element_type=jnp.float32)
    h2 = jnp.maximum(acc + b2_ref[...], 0.0).astype(jnp.bfloat16)

    # conv3 (1x1) + bn3
    y = jnp.dot(h2, w3_ref[...], preferred_element_type=jnp.float32) + b3_ref[...]

    # downsample / identity, fused (the residual never round-trips HBM)
    if has_ds:
        rows = (Hb - 1) * stride + 1
        xb = x_ref[0, pl.ds(row0, rows), :, :]
        xs = jax.lax.slice(xb, (0, 0, 0),
                           (rows, (Wo - 1) * stride + 1, Cin),
                           (stride, stride, 1))     # (Hb, Wo, Cin)
        xs = jnp.maximum(xs, 0.0)                   # block-input relu
        y = y + (jnp.dot(xs.reshape(Hb * Wo, Cin), wd_ref[...],
                         preferred_element_type=jnp.float32) + bd_ref[...])
    else:                                           # stride == 1, Cin == Cout
        xb = jnp.maximum(x_ref[0], 0.0)             # (Hb, W, Cin)
        y = y + xb.reshape(Hb * Wo, Cout).astype(jnp.float32)

    o_ref[...] = y.reshape(1, Hb, Wo, Cout).astype(o_ref.dtype)


def fused_residual_block(h1, x, p, *, stride):
    """conv2+bn2+relu + conv3+bn3 + downsample/identity + add in one kernel."""
    N, H, W, Cw = h1.shape
    Cin = x.shape[-1]
    Cout = p["w3"].shape[-1]
    Ho = (H - 1) // stride + 1
    Wo = (W - 1) // stride + 1
    Hb = _pick_band(Ho, Wo)
    n_bands = Ho // Hb
    has_ds = p["has_downsample"]
    if not has_ds:
        assert stride == 1 and Cin == Cout

    if has_ds:
        # full image resident per n; strided rows/cols read inside the kernel
        x_spec = pl.BlockSpec((1, H, W, Cin), lambda n, b: (n, 0, 0, 0))
    else:
        # identity: only the band's rows are DMA'd
        x_spec = pl.BlockSpec((1, Hb, W, Cin), lambda n, b: (n, b, 0, 0))

    in_specs = [
        pl.BlockSpec((1, H, W, Cw), lambda n, b: (n, 0, 0, 0)),   # h1, resident
        x_spec,
        pl.BlockSpec((3, 3, Cw, Cw), lambda n, b: (0, 0, 0, 0)),  # w2 (folded)
        pl.BlockSpec((1, Cw), lambda n, b: (0, 0)),               # b2
        pl.BlockSpec((Cw, Cout), lambda n, b: (0, 0)),            # w3 (folded)
        pl.BlockSpec((1, Cout), lambda n, b: (0, 0)),             # b3
    ]
    args = [h1, x, p["w2"], p["b2"].reshape(1, -1), p["w3"],
            p["b3"].reshape(1, -1)]
    if has_ds:
        in_specs += [pl.BlockSpec((Cin, Cout), lambda n, b: (0, 0)),
                     pl.BlockSpec((1, Cout), lambda n, b: (0, 0))]
        args += [p["wd"], p["bd"].reshape(1, -1)]

    kernel = functools.partial(_fused_res_block_kernel, stride=stride, Hb=Hb,
                               Wo=Wo, has_ds=has_ds)
    return pl.pallas_call(
        kernel,
        out_shape=jax.ShapeDtypeStruct((N, Ho, Wo, Cout), jnp.float32),
        grid=(N, n_bands),
        in_specs=in_specs,
        out_specs=pl.BlockSpec((1, Hb, Wo, Cout), lambda n, b: (n, b, 0, 0)),
        scratch_shapes=[pltpu.VMEM((H + 2, W + 2, Cw), h1.dtype)],
        compiler_params=pltpu.CompilerParams(
            dimension_semantics=("parallel", "arbitrary"),
            vmem_limit_bytes=_VMEM_LIMIT),
    )(*args)


# --------------------------- parameters / forward ---------------------------


def _bn_fold(gamma, beta, mean, var, eps=1e-5):
    scale = gamma * jax.lax.rsqrt(var + eps)
    return scale, beta - mean * scale


def init_params(key, inplanes, planes, stride=1, groups=1, base_width=64):
    assert groups == 1, "groups > 1 not supported"  # TODO(synk): grouped conv
    expansion = 4
    width = int(planes * (base_width / 64.0)) * groups
    out_ch = planes * expansion
    ks = jax.random.split(key, 8)

    def w(k, shape, fan_in):
        return jax.random.normal(k, shape, jnp.float32) * (1.0 / jnp.sqrt(fan_in))

    def bn(k, c):
        k1, k2, k3, k4 = jax.random.split(k, 4)
        gamma = jax.random.uniform(k1, (c,), jnp.float32, 0.5, 1.5)
        beta = jax.random.normal(k2, (c,), jnp.float32) * 0.1
        mean = jax.random.normal(k3, (c,), jnp.float32) * 0.1
        var = jax.random.uniform(k4, (c,), jnp.float32, 0.5, 1.5)
        return _bn_fold(gamma, beta, mean, var)

    def fold(wgt, scale):  # fold the BN scale into the conv output channels
        return (wgt * scale.reshape((1,) * (wgt.ndim - 1) + (-1,))
                ).astype(jnp.bfloat16)

    p = {}
    s1, b1 = bn(ks[1], width)
    p["w1"] = fold(w(ks[0], (inplanes, width), inplanes), s1)       # (Cin, W)
    p["b1"] = b1
    s2, b2 = bn(ks[3], width)
    p["w2"] = fold(w(ks[2], (3, 3, width, width), 9 * width), s2)   # HWIO
    p["b2"] = b2
    s3, b3 = bn(ks[5], out_ch)
    p["w3"] = fold(w(ks[4], (width, out_ch), width), s3)
    p["b3"] = b3
    p["has_downsample"] = (stride != 1 or inplanes != out_ch)
    if p["has_downsample"]:
        sd, bd = bn(ks[7], out_ch)
        p["wd"] = fold(w(ks[6], (inplanes, out_ch), inplanes), sd)
        p["bd"] = bd
    return p


def bottleneck_forward(x_nchw, p, stride=1):
    # NCHW -> NHWC and a single bf16 cast at the boundary.
    x = jnp.transpose(x_nchw, (0, 2, 3, 1)).astype(jnp.bfloat16)
    N, H, W, Cin = x.shape
    width = p["w1"].shape[1]

    # conv1 (1x1) + bn1 + relu, with the block-input relu fused in.
    h1 = matmul_bias_act(x.reshape(N * H * W, Cin), p["w1"], p["b1"],
                         in_relu=True, out_relu=True, out_dtype=jnp.bfloat16)
    h1 = h1.reshape(N, H, W, width)

    # conv2+bn2+relu + conv3+bn3 + downsample/identity + residual add, fused.
    out = fused_residual_block(h1, x, p, stride=stride)
    return jnp.transpose(out, (0, 3, 1, 2))                         # -> NCHW


# ------------------------------ pure-JAX reference ---------------------------


def reference_forward(x_nchw, p, stride=1):
    x = jnp.transpose(x_nchw, (0, 2, 3, 1)).astype(jnp.bfloat16).astype(jnp.float32)
    x = jnp.maximum(x, 0.0)
    dn = ("NHWC", "HWIO", "NHWC")
    f32 = lambda a: a.astype(jnp.float32)

    def c1x1(v, wgt, s=1):
        return jax.lax.conv_general_dilated(
            v, f32(wgt).reshape(1, 1, *wgt.shape), (s, s), "VALID",
            dimension_numbers=dn)

    h = jnp.maximum(c1x1(x, p["w1"]) + p["b1"], 0.0)
    h = h.astype(jnp.bfloat16).astype(jnp.float32)      # kernel keeps h1 in bf16
    h = jax.lax.conv_general_dilated(h, f32(p["w2"]), (stride, stride),
                                     ((1, 1), (1, 1)), dimension_numbers=dn)
    h = jnp.maximum(h + p["b2"], 0.0)
    h = h.astype(jnp.bfloat16).astype(jnp.float32)      # kernel casts h2 to bf16
    h = c1x1(h, p["w3"]) + p["b3"]
    if p["has_downsample"]:
        ident = c1x1(x, p["wd"], stride) + p["bd"]
    else:
        ident = x
    return jnp.transpose(h + ident, (0, 3, 1, 2))


# ------------------------------------ main ----------------------------------


if __name__ == "__main__":
    key = jax.random.PRNGKey(0)

    configs = [
        # (N, inplanes, H, W, planes, stride)
        (2, 16, 8, 8, 8, 1),   # downsample path (16 -> 32 channels)
        (2, 32, 8, 8, 8, 1),   # identity residual path (32 -> 32 channels)
    ]
    for idx, (N, inplanes, H, W, planes, stride) in enumerate(configs):
        kx, kp, key = jax.random.split(key, 3)
        x = jax.random.normal(kx, (N, inplanes, H, W), jnp.float32)   # NCHW
        params = init_params(kp, inplanes, planes, stride=stride)

        out = jax.block_until_ready(bottleneck_forward(x, params, stride=stride))
        ref = jax.block_until_ready(reference_forward(x, params, stride=stride))

        if out.shape != ref.shape:
            raise AssertionError(
                f"[cfg {idx}] shape mismatch: {out.shape} vs {ref.shape}")
        if not jnp.allclose(out, ref, atol=2e-2, rtol=2e-2):
            err = float(jnp.max(jnp.abs(out - ref)))
            raise AssertionError(f"[cfg {idx}] max abs diff {err:.3e}")

    print("KERNEL_OK")
</pallas_src>

<mosaic_0001>
module attributes {stable_mosaic.version = 11 : i64} {
  func.func @_matmul_bias_act_kernel(%arg0: i32, %arg1: i32, %arg2: memref<128x16xbf16, #tpu.memory_space<vmem>>, %arg3: memref<16x8xbf16, #tpu.memory_space<vmem>>, %arg4: memref<1x8xf32, #tpu.memory_space<vmem>>, %arg5: memref<128x8xbf16, #tpu.memory_space<vmem>>, %arg6: memref<128x8xf32, #tpu.memory_space<vmem>>) attributes {dimension_semantics = [#tpu.dimension_semantics<parallel>, #tpu.dimension_semantics<arbitrary>], iteration_bounds = array<i64: 1, 1>, scalar_prefetch = 0 : i64, scratch_operands = 1 : i64, tpu.core_type = #tpu.core_type<tc>, window_params = [{transform_indices = @transform_0, window_bounds = array<i64: 128, 16>}, {transform_indices = @transform_1, window_bounds = array<i64: 16, 8>}, {pipeline_mode = #tpu.pipeline_mode<synchronous>, transform_indices = @transform_2, window_bounds = array<i64: 1, 8>}, {transform_indices = @transform_3, window_bounds = array<i64: 128, 8>}]} {
    %c0_i32 = arith.constant 0 : i32
    %0 = arith.cmpi eq, %arg1, %c0_i32 : i32
    %1 = arith.extui %0 : i1 to i32
    %c0_i32_0 = arith.constant 0 : i32
    %2 = arith.cmpi ne, %1, %c0_i32_0 : i32
    scf.if %2 {
      %cst_11 = arith.constant 0.000000e+00 : f32
      %14 = vector.broadcast %cst_11 : f32 to vector<128x8xf32>
      %c0_12 = arith.constant 0 : index
      %c0_13 = arith.constant 0 : index
      %15 = vector.load %arg6[%c0_12, %c0_13] : memref<128x8xf32, #tpu.memory_space<vmem>>, vector<128x8xf32>
      tpu.vector_store %arg6[%c0_12, %c0_13], %14 {strides = array<i32>} : memref<128x8xf32, #tpu.memory_space<vmem>>, vector<128x8xf32>,
    } else {
    }
    %c0 = arith.constant 0 : index
    %c0_1 = arith.constant 0 : index
    %3 = vector.load %arg2[%c0, %c0_1] : memref<128x16xbf16, #tpu.memory_space<vmem>>, vector<128x16xbf16>
    %cst = arith.constant 0.000000e+00 : bf16
    %4 = vector.broadcast %cst : bf16 to vector<128x16xbf16>
    %5 = arith.maximumf %3, %4 : vector<128x16xbf16>
    %c0_2 = arith.constant 0 : index
    %c0_3 = arith.constant 0 : index
    %6 = vector.load %arg6[%c0_2, %c0_3] : memref<128x8xf32, #tpu.memory_space<vmem>>, vector<128x8xf32>
    %c0_4 = arith.constant 0 : index
    %c0_5 = arith.constant 0 : index
    %7 = vector.load %arg3[%c0_4, %c0_5] : memref<16x8xbf16, #tpu.memory_space<vmem>>, vector<16x8xbf16>
    %cst_6 = arith.constant dense<0.000000e+00> : vector<128x8xf32>
    %8 = tpu.matmul %5, %7, %cst_6 {dimension_numbers = #tpu.dot_dimension_numbers<[1], [0], [0], [1], [0, 0, 1, 1], [], []>} : vector<128x16xbf16>, vector<16x8xbf16>, vector<128x8xf32> -> vector<128x8xf32>
    %9 = arith.addf %6, %8 : vector<128x8xf32>
    %c0_7 = arith.constant 0 : index
    %c0_8 = arith.constant 0 : index
    %10 = vector.load %arg6[%c0_7, %c0_8] : memref<128x8xf32, #tpu.memory_space<vmem>>, vector<128x8xf32>
    tpu.vector_store %arg6[%c0_7, %c0_8], %9 {strides = array<i32>} : memref<128x8xf32, #tpu.memory_space<vmem>>, vector<128x8xf32>,
    %c0_i32_9 = arith.constant 0 : i32
    %11 = arith.cmpi eq, %arg1, %c0_i32_9 : i32
    %12 = arith.extui %11 : i1 to i32
    %c0_i32_10 = arith.constant 0 : i32
    %13 = arith.cmpi ne, %12, %c0_i32_10 : i32
    scf.if %13 {
      %c0_11 = arith.constant 0 : index
      %c0_12 = arith.constant 0 : index
      %14 = vector.load %arg6[%c0_11, %c0_12] : memref<128x8xf32, #tpu.memory_space<vmem>>, vector<128x8xf32>
      %c0_13 = arith.constant 0 : index
      %c0_14 = arith.constant 0 : index
      %15 = vector.load %arg4[%c0_13, %c0_14] : memref<1x8xf32, #tpu.memory_space<vmem>>, vector<1x8xf32>
      %16 = vector.broadcast %15 : vector<1x8xf32> to vector<128x8xf32>
      %17 = arith.addf %14, %16 : vector<128x8xf32>
      %cst_15 = arith.constant 0.000000e+00 : f32
      %18 = vector.broadcast %cst_15 : f32 to vector<128x8xf32>
      %19 = arith.maximumf %17, %18 : vector<128x8xf32>
      %20 = arith.truncf %19 : vector<128x8xf32> to vector<128x8xbf16>
      %c0_16 = arith.constant 0 : index
      %c0_17 = arith.constant 0 : index
      %21 = vector.load %arg5[%c0_16, %c0_17] : memref<128x8xbf16, #tpu.memory_space<vmem>>, vector<128x8xbf16>
      tpu.vector_store %arg5[%c0_16, %c0_17], %20 {strides = array<i32>} : memref<128x8xbf16, #tpu.memory_space<vmem>>, vector<128x8xbf16>,
    } else {
    }
    return
  }
  func.func @transform_0(%arg0: i32, %arg1: i32) -> (i32, i32) {
    %c0_i32 = arith.constant 0 : i32
    return %arg0, %arg1 : i32, i32
  }
  func.func @transform_1(%arg0: i32, %arg1: i32) -> (i32, i32) {
    %c0_i32 = arith.constant 0 : i32
    %c0_i32_0 = arith.constant 0 : i32
    return %arg1, %c0_i32 : i32, i32
  }
  func.func @transform_2(%arg0: i32, %arg1: i32) -> (i32, i32) {
    %c0_i32 = arith.constant 0 : i32
    %c0_i32_0 = arith.constant 0 : i32
    %c0_i32_1 = arith.constant 0 : i32
    return %c0_i32, %c0_i32_0 : i32, i32
  }
  func.func @transform_3(%arg0: i32, %arg1: i32) -> (i32, i32) {
    %c0_i32 = arith.constant 0 : i32
    %c0_i32_0 = arith.constant 0 : i32
    return %arg0, %c0_i32 : i32, i32
  }
}

</mosaic_0001>

<llo_original>
// kernel: tpu_custom_call.1
$region0: #{tpu_custom_call.1}
  #allocation0 [shape = 'u32[]', space=smem, size = 0x4, offset = 0x4, fixed_abs, tag = 'smem constant byte address 0x4 - core index']
  #allocation1 [shape = 'u32[144,128]{1,0:T(1,128)}', space=vmem, size = 0x12000, scoped, tag = 'internal scratch']
  #allocation2 [shape = 'f32[128,8]{1,0:T(8,128)}', space=vmem, size = 0x10000, scoped, tag = 'scratch operand']
  %s0 = inlined_call_operand.vmem [shape: bf16[128,16], index: 0, kind: input, shape index: {}]
  %s1 = inlined_call_operand.vmem [shape: bf16[16,8], index: 1, kind: input, shape index: {}]
  %s2 = inlined_call_operand.vmem [shape: f32[1,8], index: 2, kind: input, shape index: {}]
  %s3 = inlined_call_operand.vmem [shape: bf16[128,8], index: 3, kind: output, shape index: {}]
  %s4 = sld [smem:[#allocation0]]
  $region30: #{tpu_custom_call.1} parent=0
    _
  %s6 = ssub.s32 1, %s4
  %s7 = scalar_select 0, %s6, %s4
  // Predicated region
  $region2: #{tpu_custom_call.1} parent=0 // pred_check
    _
  $region3: #{tpu_custom_call.1} parent=0 // pred_check_branch
    %9 = sbr.rel (0) target = $region5
  $region4: #{tpu_custom_call.1} parent=0 // pred_region
    _
  $region5: #{tpu_custom_call.1} parent=0 // pred_fallthru
    _
  // Predicated region
  $region6: #{tpu_custom_call.1} parent=0 // pred_check
    _
  $region7: #{tpu_custom_call.1} parent=0 // pred_check_branch
    %11 = sbr.rel (0) target = $region9
  $region8: #{tpu_custom_call.1} parent=0 // pred_region
    _
  $region9: #{tpu_custom_call.1} parent=0 // pred_fallthru
    _
  // Predicated region
  $region10: #{tpu_custom_call.1} parent=0 // pred_check
    _
  $region11: #{tpu_custom_call.1} parent=0 // pred_check_branch
    %13 = sbr.rel (0) target = $region13
  $region12: #{tpu_custom_call.1} parent=0 // pred_region
    _
  $region13: #{tpu_custom_call.1} parent=0 // pred_fallthru
    _
  %p15 = scmp.eq.s32.totalorder 0, 0
  // Predicated region
  $region14: #{tpu_custom_call.1} parent=0 // pred_check
    %p16 = pneg %p15
  $region15: #{tpu_custom_call.1} parent=0 // pred_check_branch
    %18 = sbr.rel (%p16) target = $region17
  $region16: #{tpu_custom_call.1} parent=0 // pred_region
    %vm19 = vcmask 64512
    %20 = vst.msk [vmem:[#allocation2] sm:$0xff] %vm19, 0.0
    %21 = vst.msk [vmem:[#allocation2 + $0x8] sm:$0xff] %vm19, 0.0
    %22 = vst.msk [vmem:[#allocation2 + $0x10] sm:$0xff] %vm19, 0.0
    %23 = vst.msk [vmem:[#allocation2 + $0x18] sm:$0xff] %vm19, 0.0
    %24 = vst.msk [vmem:[#allocation2 + $0x20] sm:$0xff] %vm19, 0.0
    %25 = vst.msk [vmem:[#allocation2 + $0x28] sm:$0xff] %vm19, 0.0
    %26 = vst.msk [vmem:[#allocation2 + $0x30] sm:$0xff] %vm19, 0.0
    %27 = vst.msk [vmem:[#allocation2 + $0x38] sm:$0xff] %vm19, 0.0
    %28 = vst.msk [vmem:[#allocation2 + $0x40] sm:$0xff] %vm19, 0.0
    %29 = vst.msk [vmem:[#allocation2 + $0x48] sm:$0xff] %vm19, 0.0
    %30 = vst.msk [vmem:[#allocation2 + $0x50] sm:$0xff] %vm19, 0.0
    %31 = vst.msk [vmem:[#allocation2 + $0x58] sm:$0xff] %vm19, 0.0
    %32 = vst.msk [vmem:[#allocation2 + $0x60] sm:$0xff] %vm19, 0.0
    %33 = vst.msk [vmem:[#allocation2 + $0x68] sm:$0xff] %vm19, 0.0
    %34 = vst.msk [vmem:[#allocation2 + $0x70] sm:$0xff] %vm19, 0.0
    %35 = vst.msk [vmem:[#allocation2 + $0x78] sm:$0xff] %vm19, 0.0
  $region17: #{tpu_custom_call.1} parent=0 // pred_fallthru
    _
  %v36 = vld [vmem:[%s0] sm:$0xf]
  %v37 = vld [vmem:[%s0 + $0x4] sm:$0xf]
  %v38 = vld [vmem:[%s0 + $0x8] sm:$0xf]
  %v39 = vld [vmem:[%s0 + $0xc] sm:$0xf]
  %v40 = vld [vmem:[%s0 + $0x10] sm:$0xf]
  %v41 = vld [vmem:[%s0 + $0x14] sm:$0xf]
  %v42 = vld [vmem:[%s0 + $0x18] sm:$0xf]
  %v43 = vld [vmem:[%s0 + $0x1c] sm:$0xf]
  %v44 = vld [vmem:[%s0 + $0x20] sm:$0xf]
  %v45 = vld [vmem:[%s0 + $0x24] sm:$0xf]
  %v46 = vld [vmem:[%s0 + $0x28] sm:$0xf]
  %v47 = vld [vmem:[%s0 + $0x2c] sm:$0xf]
  %v48 = vld [vmem:[%s0 + $0x30] sm:$0xf]
  %v49 = vld [vmem:[%s0 + $0x34] sm:$0xf]
  %v50 = vld [vmem:[%s0 + $0x38] sm:$0xf]
  %v51 = vld [vmem:[%s0 + $0x3c] sm:$0xf]
  %v52 = vmax.bf16 %v36, 0
  %v53 = vmax.bf16 %v37, 0
  %v54 = vmax.bf16 %v38, 0
  %v55 = vmax.bf16 %v39, 0
  %v56 = vmax.bf16 %v40, 0
  %v57 = vmax.bf16 %v41, 0
  %v58 = vmax.bf16 %v42, 0
  %v59 = vmax.bf16 %v43, 0
  %v60 = vmax.bf16 %v44, 0
  %v61 = vmax.bf16 %v45, 0
  %v62 = vmax.bf16 %v46, 0
  %v63 = vmax.bf16 %v47, 0
  %v64 = vmax.bf16 %v48, 0
  %v65 = vmax.bf16 %v49, 0
  %v66 = vmax.bf16 %v50, 0
  %v67 = vmax.bf16 %v51, 0
  %v68 = vld [vmem:[#allocation2] sm:$0xff]
  %v69 = vld [vmem:[#allocation2 + $0x8] sm:$0xff]
  %v70 = vld [vmem:[#allocation2 + $0x10] sm:$0xff]
  %v71 = vld [vmem:[#allocation2 + $0x18] sm:$0xff]
  %v72 = vld [vmem:[#allocation2 + $0x20] sm:$0xff]
  %v73 = vld [vmem:[#allocation2 + $0x28] sm:$0xff]
  %v74 = vld [vmem:[#allocation2 + $0x30] sm:$0xff]
  %v75 = vld [vmem:[#allocation2 + $0x38] sm:$0xff]
  %v76 = vld [vmem:[#allocation2 + $0x40] sm:$0xff]
  %v77 = vld [vmem:[#allocation2 + $0x48] sm:$0xff]
  %v78 = vld [vmem:[#allocation2 + $0x50] sm:$0xff]
  %v79 = vld [vmem:[#allocation2 + $0x58] sm:$0xff]
  %v80 = vld [vmem:[#allocation2 + $0x60] sm:$0xff]
  %v81 = vld [vmem:[#allocation2 + $0x68] sm:$0xff]
  %v82 = vld [vmem:[#allocation2 + $0x70] sm:$0xff]
  %v83 = vld [vmem:[#allocation2 + $0x78] sm:$0xff]
  %v84 = vld [vmem:[%s1] sm:$0xf]
  %v85 = vld [vmem:[%s1 + $0x4] sm:$0xf]
  %v102 = vunpack.c.l.b16 %v52
  %v103 = vunpack.c.l.b16 %v53
  %v104 = vunpack.c.l.b16 %v54
  %v105 = vunpack.c.l.b16 %v55
  %v106 = vunpack.c.l.b16 %v56
  %v107 = vunpack.c.l.b16 %v57
  %v108 = vunpack.c.l.b16 %v58
  %v109 = vunpack.c.l.b16 %v59
  %v110 = vunpack.c.l.b16 %v60
  %v111 = vunpack.c.l.b16 %v61
  %v112 = vunpack.c.l.b16 %v62
  %v113 = vunpack.c.l.b16 %v63
  %v114 = vunpack.c.l.b16 %v64
  %v115 = vunpack.c.l.b16 %v65
  %v116 = vunpack.c.l.b16 %v66
  %v117 = vunpack.c.l.b16 %v67
  %v118 = vpack.c.b16 %v103, %v102
  %v119 = vpack.c.b16 %v105, %v104
  %v120 = vpack.c.b16 %v107, %v106
  %v121 = vpack.c.b16 %v109, %v108
  %v122 = vpack.c.b16 %v111, %v110
  %v123 = vpack.c.b16 %v113, %v112
  %v124 = vpack.c.b16 %v115, %v114
  %v125 = vpack.c.b16 %v117, %v116
  %v128 = vunpack.c.l.b16 %v84
  %v129 = vunpack.c.l.b16 %v85
  %v130 = vpack.c.b16 %v129, %v128
  %vm132 = vcmask 130048
  %v134 = vsel %vm132, %v118, 0
  %v137 = vsel %vm132, %v119, 0
  %v140 = vsel %vm132, %v120, 0
  %v143 = vsel %vm132, %v121, 0
  %v146 = vsel %vm132, %v122, 0
  %v149 = vsel %vm132, %v123, 0
  %v152 = vsel %vm132, %v124, 0
  %v155 = vsel %vm132, %v125, 0
  %157 = vmatprep.subr.bf16.mxu0 0
  %158 = vmatpush1.bf16.msra.mxu0 %v130
  %159 = vmatprep.subr.bf16.mxu0 0
  %160 = vmatpush1.bf16.msra.mxu0 0
  %161 = vmatprep.subr.bf16.mxu0 0
  %162 = vmatpush1.bf16.msra.mxu0 0
  %163 = vmatprep.subr.bf16.mxu0 0
  %164 = vmatpush1.bf16.msra.mxu0 0
  %165 = vmatprep.subr.bf16.mxu0 0
  %166 = vmatpush1.bf16.msra.mxu0 0
  %167 = vmatprep.subr.bf16.mxu0 0
  %168 = vmatpush1.bf16.msra.mxu0 0
  %169 = vmatprep.subr.bf16.mxu0 0
  %170 = vmatpush1.bf16.msra.mxu0 0
  %171 = vmatprep.subr.bf16.mxu0 0
  %172 = vmatpush1.bf16.msra.mxu0 0
  %173 = vmatprep.subr.bf16.mxu0 0
  %174 = vmatpush1.bf16.msra.mxu0 0
  %175 = vmatprep.subr.bf16.mxu0 0
  %176 = vmatpush1.bf16.msra.mxu0 0
  %177 = vmatprep.subr.bf16.mxu0 0
  %178 = vmatpush1.bf16.msra.mxu0 0
  %179 = vmatprep.subr.bf16.mxu0 0
  %180 = vmatpush1.bf16.msra.mxu0 0
  %181 = vmatprep.subr.bf16.mxu0 0
  %182 = vmatpush1.bf16.msra.mxu0 0
  %183 = vmatprep.subr.bf16.mxu0 0
  %184 = vmatpush1.bf16.msra.mxu0 0
  %185 = vmatprep.subr.bf16.mxu0 0
  %186 = vmatpush1.bf16.msra.mxu0 0
  %187 = vmatprep.subr.bf16.mxu0 0
  %188 = vmatpush1.bf16.msra.mxu0 0
  %189 = vmatprep.mubr.bf16.mxu0 0
  %190 = vmatmul.mubr.bf16.gmra.mrb[0].mxu0 %v134
  %v191 = vpop.f32.mrb[0].mxu0
  %v192 = vadd.f32 0.0, %v191
  %v193 = vpop.f32.mrb[0].mxu0
  %v194 = vpop.f32.mrb[0].mxu0
  %v195 = vadd.f32 0.0, %v194
  %v196 = vpop.f32.mrb[0].mxu0
  %197 = vmatprep.mubr.bf16.mxu0 0
  %198 = vmatmul.mubr.bf16.gmra.mrb[0].mxu0 %v137
  %v199 = vpop.f32.mrb[0].mxu0
  %v200 = vadd.f32 0.0, %v199
  %v201 = vpop.f32.mrb[0].mxu0
  %v202 = vpop.f32.mrb[0].mxu0
  %v203 = vadd.f32 0.0, %v202
  %v204 = vpop.f32.mrb[0].mxu0
  %205 = vmatprep.mubr.bf16.mxu0 0
  %206 = vmatmul.mubr.bf16.gmra.mrb[0].mxu0 %v140
  %v207 = vpop.f32.mrb[0].mxu0
  %v208 = vadd.f32 0.0, %v207
  %v209 = vpop.f32.mrb[0].mxu0
  %v210 = vpop.f32.mrb[0].mxu0
  %v211 = vadd.f32 0.0, %v210
  %v212 = vpop.f32.mrb[0].mxu0
  %213 = vmatprep.mubr.bf16.mxu0 0
  %214 = vmatmul.mubr.bf16.gmra.mrb[0].mxu0 %v143
  %v215 = vpop.f32.mrb[0].mxu0
  %v216 = vadd.f32 0.0, %v215
  %v217 = vpop.f32.mrb[0].mxu0
  %v218 = vpop.f32.mrb[0].mxu0
  %v219 = vadd.f32 0.0, %v218
  %v220 = vpop.f32.mrb[0].mxu0
  %221 = vmatprep.mubr.bf16.mxu0 0
  %222 = vmatmul.mubr.bf16.gmra.mrb[0].mxu0 %v146
  %v223 = vpop.f32.mrb[0].mxu0
  %v224 = vadd.f32 0.0, %v223
  %v225 = vpop.f32.mrb[0].mxu0
  %v226 = vpop.f32.mrb[0].mxu0
  %v227 = vadd.f32 0.0, %v226
  %v228 = vpop.f32.mrb[0].mxu0
  %229 = vmatprep.mubr.bf16.mxu0 0
  %230 = vmatmul.mubr.bf16.gmra.mrb[0].mxu0 %v149
  %v231 = vpop.f32.mrb[0].mxu0
  %v232 = vadd.f32 0.0, %v231
  %v233 = vpop.f32.mrb[0].mxu0
  %v234 = vpop.f32.mrb[0].mxu0
  %v235 = vadd.f32 0.0, %v234
  %v236 = vpop.f32.mrb[0].mxu0
  %237 = vmatprep.mubr.bf16.mxu0 0
  %238 = vmatmul.mubr.bf16.gmra.mrb[0].mxu0 %v152
  %v239 = vpop.f32.mrb[0].mxu0
  %v240 = vadd.f32 0.0, %v239
  %v241 = vpop.f32.mrb[0].mxu0
  %v242 = vpop.f32.mrb[0].mxu0
  %v243 = vadd.f32 0.0, %v242
  %v244 = vpop.f32.mrb[0].mxu0
  %245 = vmatprep.mubr.bf16.mxu0 0
  %246 = vmatmul.mubr.bf16.gmra.mrb[0].mxu0 %v155
  %v247 = vpop.f32.mrb[0].mxu0
  %v248 = vadd.f32 0.0, %v247
  %v249 = vpop.f32.mrb[0].mxu0
  %v250 = vpop.f32.mrb[0].mxu0
  %v251 = vadd.f32 0.0, %v250
  %v252 = vpop.f32.mrb[0].mxu0
  %253 = vdwg.mxu0
  %v254 = vadd.f32 %v68, %v192
  %v255 = vadd.f32 %v69, %v195
  %v256 = vadd.f32 %v70, %v200
  %v257 = vadd.f32 %v71, %v203
  %v258 = vadd.f32 %v72, %v208
  %v259 = vadd.f32 %v73, %v211
  %v260 = vadd.f32 %v74, %v216
  %v261 = vadd.f32 %v75, %v219
  %v262 = vadd.f32 %v76, %v224
  %v263 = vadd.f32 %v77, %v227
  %v264 = vadd.f32 %v78, %v232
  %v265 = vadd.f32 %v79, %v235
  %v266 = vadd.f32 %v80, %v240
  %v267 = vadd.f32 %v81, %v243
  %v268 = vadd.f32 %v82, %v248
  %v269 = vadd.f32 %v83, %v251
  %vm270 = vcmask 64512
  %271 = vst.msk [vmem:[#allocation2] sm:$0xff] %vm270, %v254
  %272 = vst.msk [vmem:[#allocation2 + $0x8] sm:$0xff] %vm270, %v255
  %273 = vst.msk [vmem:[#allocation2 + $0x10] sm:$0xff] %vm270, %v256
  %274 = vst.msk [vmem:[#allocation2 + $0x18] sm:$0xff] %vm270, %v257
  %275 = vst.msk [vmem:[#allocation2 + $0x20] sm:$0xff] %vm270, %v258
  %276 = vst.msk [vmem:[#allocation2 + $0x28] sm:$0xff] %vm270, %v259
  %277 = vst.msk [vmem:[#allocation2 + $0x30] sm:$0xff] %vm270, %v260
  %278 = vst.msk [vmem:[#allocation2 + $0x38] sm:$0xff] %vm270, %v261
  %279 = vst.msk [vmem:[#allocation2 + $0x40] sm:$0xff] %vm270, %v262
  %280 = vst.msk [vmem:[#allocation2 + $0x48] sm:$0xff] %vm270, %v263
  %281 = vst.msk [vmem:[#allocation2 + $0x50] sm:$0xff] %vm270, %v264
  %282 = vst.msk [vmem:[#allocation2 + $0x58] sm:$0xff] %vm270, %v265
  %283 = vst.msk [vmem:[#allocation2 + $0x60] sm:$0xff] %vm270, %v266
  %284 = vst.msk [vmem:[#allocation2 + $0x68] sm:$0xff] %vm270, %v267
  %285 = vst.msk [vmem:[#allocation2 + $0x70] sm:$0xff] %vm270, %v268
  %286 = vst.msk [vmem:[#allocation2 + $0x78] sm:$0xff] %vm270, %v269
  // Predicated region
  $region18: #{tpu_custom_call.1} parent=0 // pred_check
    %p287 = pneg %p15
  $region19: #{tpu_custom_call.1} parent=0 // pred_check_branch
    %289 = sbr.rel (%p287) target = $region21
  $region20: #{tpu_custom_call.1} parent=0 // pred_region
    %v290 = vld [vmem:[#allocation2] sm:$0xff]
    %v291 = vld [vmem:[#allocation2 + $0x8] sm:$0xff]
    %v292 = vld [vmem:[#allocation2 + $0x10] sm:$0xff]
    %v293 = vld [vmem:[#allocation2 + $0x18] sm:$0xff]
    %v294 = vld [vmem:[#allocation2 + $0x20] sm:$0xff]
    %v295 = vld [vmem:[#allocation2 + $0x28] sm:$0xff]
    %v296 = vld [vmem:[#allocation2 + $0x30] sm:$0xff]
    %v297 = vld [vmem:[#allocation2 + $0x38] sm:$0xff]
    %v298 = vld [vmem:[#allocation2 + $0x40] sm:$0xff]
    %v299 = vld [vmem:[#allocation2 + $0x48] sm:$0xff]
    %v300 = vld [vmem:[#allocation2 + $0x50] sm:$0xff]
    %v301 = vld [vmem:[#allocation2 + $0x58] sm:$0xff]
    %v302 = vld [vmem:[#allocation2 + $0x60] sm:$0xff]
    %v303 = vld [vmem:[#allocation2 + $0x68] sm:$0xff]
    %v304 = vld [vmem:[#allocation2 + $0x70] sm:$0xff]
    %v305 = vld [vmem:[#allocation2 + $0x78] sm:$0xff]
    %v306 = vld [vmem:[%s2] sm:$0x1]
    %v308 = vlaneseq
    %v309 = vshrl.u32 %v308, 7
    %v310 = vsub.s32 0, %v309
    %v311 = vrot.slane %v306, %v310
    %v313 = vadd.f32 %v290, %v311
    %v314 = vadd.f32 %v291, %v311
    %v315 = vadd.f32 %v292, %v311
    %v316 = vadd.f32 %v293, %v311
    %v317 = vadd.f32 %v294, %v311
    %v318 = vadd.f32 %v295, %v311
    %v319 = vadd.f32 %v296, %v311
    %v320 = vadd.f32 %v297, %v311
    %v321 = vadd.f32 %v298, %v311
    %v322 = vadd.f32 %v299, %v311
    %v323 = vadd.f32 %v300, %v311
    %v324 = vadd.f32 %v301, %v311
    %v325 = vadd.f32 %v302, %v311
    %v326 = vadd.f32 %v303, %v311
    %v327 = vadd.f32 %v304, %v311
    %v328 = vadd.f32 %v305, %v311
    %v329 = vmax.f32 %v313, 0.0
    %v330 = vmax.f32 %v314, 0.0
    %v331 = vmax.f32 %v315, 0.0
    %v332 = vmax.f32 %v316, 0.0
    %v333 = vmax.f32 %v317, 0.0
    %v334 = vmax.f32 %v318, 0.0
    %v335 = vmax.f32 %v319, 0.0
    %v336 = vmax.f32 %v320, 0.0
    %v337 = vmax.f32 %v321, 0.0
    %v338 = vmax.f32 %v322, 0.0
    %v339 = vmax.f32 %v323, 0.0
    %v340 = vmax.f32 %v324, 0.0
    %v341 = vmax.f32 %v325, 0.0
    %v342 = vmax.f32 %v326, 0.0
    %v343 = vmax.f32 %v327, 0.0
    %v344 = vmax.f32 %v328, 0.0
    %v345 = vpack.c.bf16 %v330, %v329
    %v346 = vpack.c.bf16 %v332, %v331
    %v347 = vpack.c.bf16 %v334, %v333
    %v348 = vpack.c.bf16 %v336, %v335
    %v349 = vpack.c.bf16 %v338, %v337
    %v350 = vpack.c.bf16 %v340, %v339
    %v351 = vpack.c.bf16 %v342, %v341
    %v352 = vpack.c.bf16 %v344, %v343
    %v361 = vunpack.c.l.b16 %v345
    %v362 = vunpack.c.h.b16 %v345
    %v363 = vunpack.c.l.b16 %v346
    %v364 = vunpack.c.h.b16 %v346
    %v365 = vunpack.c.l.b16 %v347
    %v366 = vunpack.c.h.b16 %v347
    %v367 = vunpack.c.l.b16 %v348
    %v368 = vunpack.c.h.b16 %v348
    %v369 = vunpack.c.l.b16 %v349
    %v370 = vunpack.c.h.b16 %v349
    %v371 = vunpack.c.l.b16 %v350
    %v372 = vunpack.c.h.b16 %v350
    %v373 = vunpack.c.l.b16 %v351
    %v374 = vunpack.c.h.b16 %v351
    %v375 = vunpack.c.l.b16 %v352
    %v376 = vunpack.c.h.b16 %v352
    %v377 = vpack.c.b16 %v361, %v361
    %v378 = vpack.c.b16 %v362, %v362
    %v379 = vpack.c.b16 %v363, %v363
    %v380 = vpack.c.b16 %v364, %v364
    %v381 = vpack.c.b16 %v365, %v365
    %v382 = vpack.c.b16 %v366, %v366
    %v383 = vpack.c.b16 %v367, %v367
    %v384 = vpack.c.b16 %v368, %v368
    %v385 = vpack.c.b16 %v369, %v369
    %v386 = vpack.c.b16 %v370, %v370
    %v387 = vpack.c.b16 %v371, %v371
    %v388 = vpack.c.b16 %v372, %v372
    %v389 = vpack.c.b16 %v373, %v373
    %v390 = vpack.c.b16 %v374, %v374
    %v391 = vpack.c.b16 %v375, %v375
    %v392 = vpack.c.b16 %v376, %v376
    %vm409 = vcmask 60416
    %410 = vst.msk [vmem:[%s3] sm:$0xf] %vm409, %v377
    %411 = vst.msk [vmem:[%s3 + $0x4] sm:$0xf] %vm409, %v378
    %412 = vst.msk [vmem:[%s3 + $0x8] sm:$0xf] %vm409, %v379
    %413 = vst.msk [vmem:[%s3 + $0xc] sm:$0xf] %vm409, %v380
    %414 = vst.msk [vmem:[%s3 + $0x10] sm:$0xf] %vm409, %v381
    %415 = vst.msk [vmem:[%s3 + $0x14] sm:$0xf] %vm409, %v382
    %416 = vst.msk [vmem:[%s3 + $0x18] sm:$0xf] %vm409, %v383
    %417 = vst.msk [vmem:[%s3 + $0x1c] sm:$0xf] %vm409, %v384
    %418 = vst.msk [vmem:[%s3 + $0x20] sm:$0xf] %vm409, %v385
    %419 = vst.msk [vmem:[%s3 + $0x24] sm:$0xf] %vm409, %v386
    %420 = vst.msk [vmem:[%s3 + $0x28] sm:$0xf] %vm409, %v387
    %421 = vst.msk [vmem:[%s3 + $0x2c] sm:$0xf] %vm409, %v388
    %422 = vst.msk [vmem:[%s3 + $0x30] sm:$0xf] %vm409, %v389
    %423 = vst.msk [vmem:[%s3 + $0x34] sm:$0xf] %vm409, %v390
    %424 = vst.msk [vmem:[%s3 + $0x38] sm:$0xf] %vm409, %v391
    %425 = vst.msk [vmem:[%s3 + $0x3c] sm:$0xf] %vm409, %v392
  $region21: #{tpu_custom_call.1} parent=0 // pred_fallthru
    _
  // Predicated region
  $region22: #{tpu_custom_call.1} parent=0 // pred_check
    _
  $region23: #{tpu_custom_call.1} parent=0 // pred_check_branch
    %427 = sbr.rel (0) target = $region25
  $region24: #{tpu_custom_call.1} parent=0 // pred_region
    _
  $region25: #{tpu_custom_call.1} parent=0 // pred_fallthru
    _
  // Predicated region
  $region26: #{tpu_custom_call.1} parent=0 // pred_check
    _
  $region27: #{tpu_custom_call.1} parent=0 // pred_check_branch
    %429 = sbr.rel (0) target = $region29
  $region28: #{tpu_custom_call.1} parent=0 // pred_region
    _
  $region29: #{tpu_custom_call.1} parent=0 // pred_fallthru
    _

</llo_original>
